<compile_context>
chip_gen: v5e
topology: v5e:2x2
jax: 0.10.0
libtpu: 0.0.40
codegen_flags: <defaults>
</compile_context>

<pallas_src>
import functools

import jax
import jax.numpy as jnp
from jax.experimental import pallas as pl
from jax.experimental.pallas import tpu as pltpu


def _spatial_gather_kernel(probs_ref, feats_ref, out_ref,
                           m_ref, l_ref, acc_ref, *, scale, hw, tile):
    # probs_ref: (1, K, T)   feats_ref: (1, C, T)   out_ref: (1, K, C)
    # m_ref: (K, 1) f32      l_ref: (K, 1) f32      acc_ref: (K, C) f32
    t = pl.program_id(1)
    n_t = pl.num_programs(1)

    @pl.when(t == 0)
    def _init():
        m_ref[...] = jnp.full(m_ref.shape, -jnp.inf, dtype=jnp.float32)
        l_ref[...] = jnp.zeros(l_ref.shape, dtype=jnp.float32)
        acc_ref[...] = jnp.zeros(acc_ref.shape, dtype=jnp.float32)

    p = probs_ref[0].astype(jnp.float32)        # (K, T), softmax path in f32
    if scale != 1.0:                            # static skip for scale == 1
        p = p * scale
    f = feats_ref[0]                            # (C, T), keep input dtype

    if hw % tile != 0:
        # Mask the out-of-range columns of the last (partial) tile.
        pcol = jax.lax.broadcasted_iota(jnp.int32, p.shape, 1) + t * tile
        p = jnp.where(pcol < hw, p, -jnp.inf)
        fcol = jax.lax.broadcasted_iota(jnp.int32, f.shape, 1) + t * tile
        f = jnp.where(fcol < hw, f, jnp.zeros_like(f))

    # --- online softmax update over the HW tiles -------------------------
    m_prev = m_ref[...]                                    # (K, 1)
    m_new = jnp.maximum(m_prev, jnp.max(p, axis=-1, keepdims=True))
    alpha = jnp.exp(m_prev - m_new)                        # (K, 1)
    e = jnp.exp(p - m_new)                                 # (K, T), unnormalized

    l_ref[...] = alpha * l_ref[...] + jnp.sum(e, axis=-1, keepdims=True)

    # (K, T) x (C, T) contracted over T -> (K, C); no transpose of feats.
    partial = jax.lax.dot_general(
        e.astype(f.dtype), f,
        dimension_numbers=(((1,), (1,)), ((), ())),
        preferred_element_type=jnp.float32)
    acc_ref[...] = alpha * acc_ref[...] + partial
    m_ref[...] = m_new

    @pl.when(t == n_t - 1)
    def _finalize():
        # Deferred normalization: one K*C scaling instead of K*HW per tile.
        inv_l = pl.reciprocal(l_ref[...], approx=False)    # (K, 1)
        out_ref[0] = (acc_ref[...] * inv_l).astype(out_ref.dtype)


def spatial_gather(feats, probs, scale=1.0, hw_tile=2048):
    """feats: (B, C, H, W), probs: (B, K, H, W) -> (B, C, K, 1)."""
    B, C, H, W = feats.shape
    _, K, _, _ = probs.shape
    HW = H * W

    feats_flat = feats.reshape(B, C, HW)
    probs_flat = probs.reshape(B, K, HW)

    # Pick the HW tile: full extent if it fits the budget, otherwise the
    # largest multiple of 128 <= hw_tile (lane-aligned blocks).
    # hw_tile=2048 keeps both double-buffered tiles small enough for v7x's
    # 64 MiB VMEM at C=512; on v6e a bigger tile (4096-8192) plus a raised
    # vmem_limit_bytes amortizes the per-step overhead further.
    if HW <= hw_tile:
        tile = HW
    else:
        tile = max((hw_tile // 128) * 128, 128)
    n_hw = pl.cdiv(HW, tile)

    kernel = functools.partial(
        _spatial_gather_kernel, scale=float(scale), hw=HW, tile=tile)

    out = pl.pallas_call(
        kernel,
        out_shape=jax.ShapeDtypeStruct((B, K, C), feats.dtype),
        grid_spec=pltpu.PrefetchScalarGridSpec(
            num_scalar_prefetch=0,
            grid=(B, n_hw),
            in_specs=[
                pl.BlockSpec((1, K, tile), lambda b, t: (b, 0, t)),
                pl.BlockSpec((1, C, tile), lambda b, t: (b, 0, t)),
            ],
            # Output block is constant across the HW axis -> accumulator
            # resident in VMEM, written once at the final HW step.
            out_specs=pl.BlockSpec((1, K, C), lambda b, t: (b, 0, 0)),
            scratch_shapes=[
                pltpu.VMEM((K, 1), jnp.float32),   # running max
                pltpu.VMEM((K, 1), jnp.float32),   # running denom
                pltpu.VMEM((K, C), jnp.float32),   # (K, C) accumulator
            ],
        ),
        compiler_params=pltpu.CompilerParams(
            dimension_semantics=("parallel", "arbitrary"),
        ),
    )(probs_flat, feats_flat)

    # (B, K, C) -> (B, C, K, 1), matching torch's permute(0, 2, 1).unsqueeze(3)
    return jnp.transpose(out, (0, 2, 1))[..., None]


def _reference(feats, probs, scale):
    B, C, H, W = feats.shape
    _, K, _, _ = probs.shape
    p = probs.reshape(B, K, H * W)
    f = feats.reshape(B, C, H * W).transpose(0, 2, 1)
    sm = jax.nn.softmax(scale * p, axis=2)
    return jnp.einsum("bkn,bnc->bkc", sm, f).transpose(0, 2, 1)[..., None]


if __name__ == "__main__":
    key = jax.random.PRNGKey(0)
    k1, k2, k3, k4 = jax.random.split(key, 4)

    # Case 1: HW divisible by the tile, 2 HW tiles -> exercises the
    # cross-tile online-softmax accumulation (scale == 1 static fast path).
    B, C, K, H, W = 2, 8, 4, 16, 16
    feats = jax.random.normal(k1, (B, C, H, W), dtype=jnp.float32)
    probs = jax.random.normal(k2, (B, K, H, W), dtype=jnp.float32)
    out = spatial_gather(feats, probs, scale=1.0, hw_tile=128)
    jax.block_until_ready(out)
    ref = _reference(feats, probs, 1.0)
    assert out.shape == (B, C, K, 1), out.shape
    assert jnp.allclose(out, ref, atol=1e-5, rtol=1e-5)

    # Case 2: ragged HW (324 = 2*128 + 68) -> exercises the remainder-tile
    # masking, plus a non-unit scale.
    H2, W2 = 18, 18
    feats2 = jax.random.normal(k3, (B, C, H2, W2), dtype=jnp.float32)
    probs2 = jax.random.normal(k4, (B, K, H2, W2), dtype=jnp.float32)
    out2 = spatial_gather(feats2, probs2, scale=2.0, hw_tile=128)
    jax.block_until_ready(out2)
    ref2 = _reference(feats2, probs2, 2.0)
    assert out2.shape == (B, C, K, 1), out2.shape
    assert jnp.allclose(out2, ref2, atol=1e-5, rtol=1e-5)

    print("KERNEL_OK")
</pallas_src>

<mosaic_0001>
module attributes {stable_mosaic.version = 11 : i64} {
  func.func @_spatial_gather_kernel(%arg0: i32, %arg1: i32, %arg2: memref<1x4x128xf32, #tpu.memory_space<vmem>>, %arg3: memref<1x8x128xf32, #tpu.memory_space<vmem>>, %arg4: memref<1x4x8xf32, #tpu.memory_space<vmem>>, %arg5: memref<4x1xf32, #tpu.memory_space<vmem>>, %arg6: memref<4x1xf32, #tpu.memory_space<vmem>>, %arg7: memref<4x8xf32, #tpu.memory_space<vmem>>) attributes {dimension_semantics = [#tpu.dimension_semantics<parallel>, #tpu.dimension_semantics<arbitrary>], iteration_bounds = array<i64: 2, 2>, scalar_prefetch = 0 : i64, scratch_operands = 3 : i64, tpu.core_type = #tpu.core_type<tc>, window_params = [{transform_indices = @transform_0, window_bounds = array<i64: 1, 4, 128>}, {transform_indices = @transform_1, window_bounds = array<i64: 1, 8, 128>}, {transform_indices = @transform_2, window_bounds = array<i64: 1, 4, 8>}]} {
    %c0_i32 = arith.constant 0 : i32
    %0 = arith.cmpi eq, %arg1, %c0_i32 : i32
    %1 = arith.extui %0 : i1 to i32
    %c0_i32_0 = arith.constant 0 : i32
    %2 = arith.cmpi ne, %1, %c0_i32_0 : i32
    scf.if %2 {
      %cst_21 = arith.constant 0xFF800000 : f32
      %32 = vector.broadcast %cst_21 : f32 to vector<4x1xf32>
      %c0_22 = arith.constant 0 : index
      %c0_23 = arith.constant 0 : index
      %33 = vector.load %arg5[%c0_22, %c0_23] : memref<4x1xf32, #tpu.memory_space<vmem>>, vector<4x1xf32>
      tpu.vector_store %arg5[%c0_22, %c0_23], %32 {strides = array<i32>} : memref<4x1xf32, #tpu.memory_space<vmem>>, vector<4x1xf32>,
      %cst_24 = arith.constant 0.000000e+00 : f32
      %34 = vector.broadcast %cst_24 : f32 to vector<4x1xf32>
      %c0_25 = arith.constant 0 : index
      %c0_26 = arith.constant 0 : index
      %35 = vector.load %arg6[%c0_25, %c0_26] : memref<4x1xf32, #tpu.memory_space<vmem>>, vector<4x1xf32>
      tpu.vector_store %arg6[%c0_25, %c0_26], %34 {strides = array<i32>} : memref<4x1xf32, #tpu.memory_space<vmem>>, vector<4x1xf32>,
      %cst_27 = arith.constant 0.000000e+00 : f32
      %36 = vector.broadcast %cst_27 : f32 to vector<4x8xf32>
      %c0_28 = arith.constant 0 : index
      %c0_29 = arith.constant 0 : index
      %37 = vector.load %arg7[%c0_28, %c0_29] : memref<4x8xf32, #tpu.memory_space<vmem>>, vector<4x8xf32>
      tpu.vector_store %arg7[%c0_28, %c0_29], %36 {strides = array<i32>} : memref<4x8xf32, #tpu.memory_space<vmem>>, vector<4x8xf32>,
    } else {
    }
    %c0 = arith.constant 0 : index
    %c0_1 = arith.constant 0 : index
    %c0_2 = arith.constant 0 : index
    %3 = vector.load %arg2[%c0, %c0_1, %c0_2] : memref<1x4x128xf32, #tpu.memory_space<vmem>>, vector<1x4x128xf32>
    %4 = vector.shape_cast %3 : vector<1x4x128xf32> to vector<4x128xf32>
    %c0_3 = arith.constant 0 : index
    %c0_4 = arith.constant 0 : index
    %c0_5 = arith.constant 0 : index
    %5 = vector.load %arg3[%c0_3, %c0_4, %c0_5] : memref<1x8x128xf32, #tpu.memory_space<vmem>>, vector<1x8x128xf32>
    %6 = vector.shape_cast %5 : vector<1x8x128xf32> to vector<8x128xf32>
    %c0_6 = arith.constant 0 : index
    %c0_7 = arith.constant 0 : index
    %7 = vector.load %arg5[%c0_6, %c0_7] : memref<4x1xf32, #tpu.memory_space<vmem>>, vector<4x1xf32>
    %cst = arith.constant dense<0xFF800000> : vector<4xf32>
    %8 = vector.multi_reduction <maximumf>, %4, %cst [1] : vector<4x128xf32> to vector<4xf32>
    %9 = vector.shape_cast %8 : vector<4xf32> to vector<4x1xf32>
    %10 = arith.maximumf %7, %9 : vector<4x1xf32>
    %11 = arith.subf %7, %10 : vector<4x1xf32>
    %12 = math.exp %11 : vector<4x1xf32>
    %13 = vector.broadcast %10 : vector<4x1xf32> to vector<4x128xf32>
    %14 = arith.subf %4, %13 : vector<4x128xf32>
    %15 = math.exp %14 : vector<4x128xf32>
    %c0_8 = arith.constant 0 : index
    %c0_9 = arith.constant 0 : index
    %16 = vector.load %arg6[%c0_8, %c0_9] : memref<4x1xf32, #tpu.memory_space<vmem>>, vector<4x1xf32>
    %17 = arith.mulf %12, %16 : vector<4x1xf32>
    %cst_10 = arith.constant dense<0.000000e+00> : vector<4xf32>
    %18 = vector.multi_reduction <add>, %15, %cst_10 [1] : vector<4x128xf32> to vector<4xf32>
    %19 = vector.shape_cast %18 : vector<4xf32> to vector<4x1xf32>
    %20 = arith.addf %17, %19 : vector<4x1xf32>
    %c0_11 = arith.constant 0 : index
    %c0_12 = arith.constant 0 : index
    %21 = vector.load %arg6[%c0_11, %c0_12] : memref<4x1xf32, #tpu.memory_space<vmem>>, vector<4x1xf32>
    tpu.vector_store %arg6[%c0_11, %c0_12], %20 {strides = array<i32>} : memref<4x1xf32, #tpu.memory_space<vmem>>, vector<4x1xf32>,
    %cst_13 = arith.constant dense<0.000000e+00> : vector<4x8xf32>
    %22 = tpu.matmul %15, %6, %cst_13 {dimension_numbers = #tpu.dot_dimension_numbers<[1], [1], [0], [0], [0, 0, 1, 0], [], []>} : vector<4x128xf32>, vector<8x128xf32>, vector<4x8xf32> -> vector<4x8xf32>
    %c0_14 = arith.constant 0 : index
    %c0_15 = arith.constant 0 : index
    %23 = vector.load %arg7[%c0_14, %c0_15] : memref<4x8xf32, #tpu.memory_space<vmem>>, vector<4x8xf32>
    %24 = vector.broadcast %12 : vector<4x1xf32> to vector<4x8xf32>
    %25 = arith.mulf %24, %23 : vector<4x8xf32>
    %26 = arith.addf %25, %22 : vector<4x8xf32>
    %c0_16 = arith.constant 0 : index
    %c0_17 = arith.constant 0 : index
    %27 = vector.load %arg7[%c0_16, %c0_17] : memref<4x8xf32, #tpu.memory_space<vmem>>, vector<4x8xf32>
    tpu.vector_store %arg7[%c0_16, %c0_17], %26 {strides = array<i32>} : memref<4x8xf32, #tpu.memory_space<vmem>>, vector<4x8xf32>,
    %c0_18 = arith.constant 0 : index
    %c0_19 = arith.constant 0 : index
    %28 = vector.load %arg5[%c0_18, %c0_19] : memref<4x1xf32, #tpu.memory_space<vmem>>, vector<4x1xf32>
    tpu.vector_store %arg5[%c0_18, %c0_19], %10 {strides = array<i32>} : memref<4x1xf32, #tpu.memory_space<vmem>>, vector<4x1xf32>,
    %c1_i32 = arith.constant 1 : i32
    %29 = arith.cmpi eq, %arg1, %c1_i32 : i32
    %30 = arith.extui %29 : i1 to i32
    %c0_i32_20 = arith.constant 0 : i32
    %31 = arith.cmpi ne, %30, %c0_i32_20 : i32
    scf.if %31 {
      %c0_21 = arith.constant 0 : index
      %c0_22 = arith.constant 0 : index
      %32 = vector.load %arg6[%c0_21, %c0_22] : memref<4x1xf32, #tpu.memory_space<vmem>>, vector<4x1xf32>
      %33 = tpu.reciprocal %32 : vector<4x1xf32> -> vector<4x1xf32>
      %c0_23 = arith.constant 0 : index
      %c0_24 = arith.constant 0 : index
      %34 = vector.load %arg7[%c0_23, %c0_24] : memref<4x8xf32, #tpu.memory_space<vmem>>, vector<4x8xf32>
      %35 = vector.broadcast %33 : vector<4x1xf32> to vector<4x8xf32>
      %36 = arith.mulf %34, %35 : vector<4x8xf32>
      %c0_25 = arith.constant 0 : index
      %c0_26 = arith.constant 0 : index
      %c0_27 = arith.constant 0 : index
      %37 = vector.load %arg4[%c0_25, %c0_26, %c0_27] : memref<1x4x8xf32, #tpu.memory_space<vmem>>, vector<1x4x8xf32>
      %38 = vector.shape_cast %37 : vector<1x4x8xf32> to vector<4x8xf32>
      %39 = vector.shape_cast %36 : vector<4x8xf32> to vector<1x4x8xf32>
      tpu.vector_store %arg4[%c0_25, %c0_26, %c0_27], %39 {strides = array<i32>} : memref<1x4x8xf32, #tpu.memory_space<vmem>>, vector<1x4x8xf32>,
    } else {
    }
    return
  }
  func.func @transform_0(%arg0: i32, %arg1: i32) -> (i32, i32, i32) {
    %c0_i32 = arith.constant 0 : i32
    %c0_i32_0 = arith.constant 0 : i32
    return %arg0, %c0_i32, %arg1 : i32, i32, i32
  }
  func.func @transform_1(%arg0: i32, %arg1: i32) -> (i32, i32, i32) {
    %c0_i32 = arith.constant 0 : i32
    %c0_i32_0 = arith.constant 0 : i32
    return %arg0, %c0_i32, %arg1 : i32, i32, i32
  }
  func.func @transform_2(%arg0: i32, %arg1: i32) -> (i32, i32, i32) {
    %c0_i32 = arith.constant 0 : i32
    %c0_i32_0 = arith.constant 0 : i32
    %c0_i32_1 = arith.constant 0 : i32
    return %arg0, %c0_i32, %c0_i32_0 : i32, i32, i32
  }
}

</mosaic_0001>

<llo_original>
// kernel: tpu_custom_call.1
$region0: #{tpu_custom_call.1}
  #allocation0 [shape = 'u32[]', space=smem, size = 0x4, offset = 0x4, fixed_abs, tag = 'smem constant byte address 0x4 - core index']
  #allocation1 [shape = 'u32[72,128]{1,0:T(1,128)}', space=vmem, size = 0x9000, scoped, tag = 'internal scratch']
  #allocation2 [shape = 'f32[4,1]{1,0:T(4,128)}', space=vmem, size = 0x800, scoped, tag = 'scratch operand']
  #allocation3 [shape = 'f32[4,1]{1,0:T(4,128)}', space=vmem, size = 0x800, scoped, tag = 'scratch operand']
  #allocation4 [shape = 'f32[4,8]{1,0:T(4,128)}', space=vmem, size = 0x800, scoped, tag = 'scratch operand']
  %s0 = inlined_call_operand.hbm [shape: f32[2,4,256], index: 0, kind: input, shape index: {}]
  %s1 = inlined_call_operand.hbm [shape: f32[2,8,256], index: 1, kind: input, shape index: {}]
  %s2 = inlined_call_operand.hbm [shape: f32[2,4,8], index: 2, kind: output, shape index: {}]
  %s3 = sld [smem:[#allocation0]]
  $region57: #{tpu_custom_call.1} parent=0
    _
  %s5 = ssub.s32 1, %s3
  %s6 = scalar_select 0, %s5, %s3
  $region1: #{tpu_custom_call.1} parent=0
    #allocation5 [shape = 'u8[4096]{0}', space=vmem, size = 0x1000, scoped, tag = 'input window, operand 0']
    #allocation6 [shape = 's32[2]{0}', space=sflag, size = 0x8, scoped, tag = 'scoped memory for tpu_custom_call.1']
    #allocation7 [shape = 's32[2]{0}', space=sflag, size = 0x8, scoped, tag = 'scoped memory for tpu_custom_call.1']
    #allocation8 [shape = 'u8[8192]{0}', space=vmem, size = 0x2000, scoped, tag = 'input window, operand 1']
    #allocation9 [shape = 's32[2]{0}', space=sflag, size = 0x8, scoped, tag = 'scoped memory for tpu_custom_call.1']
    #allocation10 [shape = 'u8[4096]{0}', space=vmem, size = 0x1000, scoped, tag = 'output window, operand 0']
    %7 = vsyncpa [#allocation6], 0
    %s8 = scalar_lea.sflag [#allocation6], 1
    %9 = vsyncpa %s8, 0
    %10 = vsyncpa [#allocation9], 0
    %s11 = scalar_lea.sflag [#allocation9], 1
    %12 = vsyncpa %s11, 0
    %13 = vsyncpa [#allocation7], 0
    %s14 = scalar_lea.sflag [#allocation7], 1
    %15 = vsyncpa %s14, 0
    loop: start=0, step=1, limit=6
    $region2: #{tpu_custom_call.1} parent=1 // loop_pre_header
      _
    $region3: #{tpu_custom_call.1} parent=1 // loop_header
      %s17 = sphi 0, %s21
      %p18 = scmp.ge.s32.totalorder %s17, 6
      %s24 = sphi 0, %s36
      %s25 = sphi 0, %s32
      %s26 = sphi 0, %s24
      %s27 = sphi 0, %s25
      %s28 = sphi 0, %s26
      %s29 = sphi 0, %s27
      %s41 = sphi 0, %s43
      %s44 = sphi 0, %s41
      %s45 = sphi 0, %s44
      %s61 = sphi 0, %s45
      %s69 = sphi 0, %s71
      %s72 = sphi 0, %s69
      %s73 = sphi 0, %s72
      %s89 = sphi 0, %s73
      %s95 = sphi 0, %s97
      %s98 = sphi 0, %s95
      %s99 = sphi 0, %s98
      %s115 = sphi 0, %s99
    $region4: #{tpu_custom_call.1} parent=1 // loop_header_branch
      %20 = sbr.rel (%p18) target = $region8
    $region5: #{tpu_custom_call.1} parent=1 // loop_body
      %s22 = ssub.s32 %s17, 1
      %s23 = ssub.s32 %s17, 2
      %s30 = sadd.s32 1, %s25
      %p31 = scmp.ge.s32.totalorder %s30, 2
      %s32 = scalar_select %p31, 0, %s30
      %s33 = sadd.s32 1, %s24
      %s34 = scalar_select %p31, %s33, %s24
      %p35 = scmp.ge.s32.totalorder %s34, 2
      %s36 = scalar_select %p35, 0, %s34
      %s37 = ssub.s32 %s24, %s36
      %s38 = ssub.s32 %s25, %s32
      %s39 = sor.u32 %s37, %s38
      %p40 = scmp.eq.s32.totalorder %s39, 0
      %s42 = sadd.s32 %s41, 1
      %s43 = scalar_select %p40, %s41, %s42
      %p46 = pneg %p40
      %p47 = scmp.eq.s32.totalorder %s17, 3
      %p48 = por %p46, %p47
      %p49 = scmp.ne.s32.totalorder %s41, %s44
      %p50 = scmp.eq.s32.totalorder %s17, 0
      %p51 = por %p49, %p50
      %p52 = scmp.ne.s32.totalorder %s41, %s44
      %p53 = scmp.eq.s32.totalorder %s22, 3
      %p54 = por %p52, %p53
      %p55 = scmp.ne.s32.totalorder %s44, %s45
      %p56 = scmp.eq.s32.totalorder %s22, 0
      %p57 = por %p55, %p56
      %p58 = scmp.ne.s32.totalorder %s44, %s45
      %p59 = scmp.eq.s32.totalorder %s23, 3
      %p60 = por %p58, %p59
      %p62 = scmp.ne.s32.totalorder %s45, %s61
      %p63 = scmp.eq.s32.totalorder %s23, 0
      %p64 = por %p62, %p63
      %s65 = ssub.s32 %s24, %s36
      %s66 = ssub.s32 %s25, %s32
      %s67 = sor.u32 %s65, %s66
      %p68 = scmp.eq.s32.totalorder %s67, 0
      %s70 = sadd.s32 %s69, 1
      %s71 = scalar_select %p68, %s69, %s70
      %p74 = pneg %p68
      %p75 = scmp.eq.s32.totalorder %s17, 3
      %p76 = por %p74, %p75
      %p77 = scmp.ne.s32.totalorder %s69, %s72
      %p78 = scmp.eq.s32.totalorder %s17, 0
      %p79 = por %p77, %p78
      %p80 = scmp.ne.s32.totalorder %s69, %s72
      %p81 = scmp.eq.s32.totalorder %s22, 3
      %p82 = por %p80, %p81
      %p83 = scmp.ne.s32.totalorder %s72, %s73
      %p84 = scmp.eq.s32.totalorder %s22, 0
      %p85 = por %p83, %p84
      %p86 = scmp.ne.s32.totalorder %s72, %s73
      %p87 = scmp.eq.s32.totalorder %s23, 3
      %p88 = por %p86, %p87
      %p90 = scmp.ne.s32.totalorder %s73, %s89
      %p91 = scmp.eq.s32.totalorder %s23, 0
      %p92 = por %p90, %p91
      %s93 = ssub.s32 %s24, %s36
      %p94 = scmp.eq.s32.totalorder %s93, 0
      %s96 = sadd.s32 %s95, 1
      %s97 = scalar_select %p94, %s95, %s96
      %p100 = pneg %p94
      %p101 = scmp.eq.s32.totalorder %s17, 3
      %p102 = por %p100, %p101
      %p103 = scmp.ne.s32.totalorder %s95, %s98
      %p104 = scmp.eq.s32.totalorder %s17, 0
      %p105 = por %p103, %p104
      %p106 = scmp.ne.s32.totalorder %s95, %s98
      %p107 = scmp.eq.s32.totalorder %s22, 3
      %p108 = por %p106, %p107
      %p109 = scmp.ne.s32.totalorder %s98, %s99
      %p110 = scmp.eq.s32.totalorder %s22, 0
      %p111 = por %p109, %p110
      %p112 = scmp.ne.s32.totalorder %s98, %s99
      %p113 = scmp.eq.s32.totalorder %s23, 3
      %p114 = por %p112, %p113
      %p116 = scmp.ne.s32.totalorder %s99, %s115
      %p117 = scmp.eq.s32.totalorder %s23, 0
      %p118 = por %p116, %p117
      %p119 = scmp.le.s32.totalorder 1, %s17
      %p120 = scmp.lt.s32.totalorder %s17, 5
      %p121 = pnand %p119, %p120
      %p122 = pneg %p121
      // Predicated region
      $region9: #{tpu_custom_call.1} parent=5 // pred_check
        _
      $region10: #{tpu_custom_call.1} parent=5 // pred_check_branch
        %124 = sbr.rel (%p121) target = $region12
      $region11: #{tpu_custom_call.1} parent=5 // pred_region
        %s125 = ssub.s32 %s17, 1
      $region12: #{tpu_custom_call.1} parent=5 // pred_fallthru
        _
      %p126 = scmp.lt.s32.totalorder %s17, 4
      // Predicated region
      $region13: #{tpu_custom_call.1} parent=5 // pred_check
        %p127 = pneg %p126
      $region14: #{tpu_custom_call.1} parent=5 // pred_check_branch
        %129 = sbr.rel (%p127) target = $region16
      $region15: #{tpu_custom_call.1} parent=5 // pred_region
        // Predicated region
        $region17: #{tpu_custom_call.1} parent=15 // pred_check
          %p130 = pneg %p51
        $region18: #{tpu_custom_call.1} parent=15 // pred_check_branch
          %132 = sbr.rel (%p130) target = $region20
        $region19: #{tpu_custom_call.1} parent=15 // pred_region
          %s133 = sand.u32 %s41, 1
          %s134 = scalar_lea.sflag [#allocation6], %s133
          %s135 = sand.u32 %s41, 1
          %s136 = smul.addr %s135, 4
          %s137 = scalar_lea.vmem [#allocation5], %s136
          %139 = vsyncadd %s134, 0
          %s140 = smul.addr %s24, 2
          %s141 = sadd.s32 %s25, %s140
          %s142 = smul.addr %s141, 4
          %s143 = scalar_lea.hbm %s0, %s142
          %s145 = sshll.u32 %s143, 4
          %s146 = int_to_ptr.hbm [resolvable:$true] %s145
          %s147 = sshll.u32 %s137, 4
          %s148 = int_to_ptr.vmem [resolvable:$true] %s147
          %150 = dma.hbm_to_vmem [thread:$0]  %s146, 64, %s148, %s134
        $region20: #{tpu_custom_call.1} parent=15 // pred_fallthru
          _
        // Predicated region
        $region21: #{tpu_custom_call.1} parent=15 // pred_check
          %p151 = pneg %p79
        $region22: #{tpu_custom_call.1} parent=15 // pred_check_branch
          %153 = sbr.rel (%p151) target = $region24
        $region23: #{tpu_custom_call.1} parent=15 // pred_region
          %s154 = sand.u32 %s69, 1
          %s155 = scalar_lea.sflag [#allocation9], %s154
          %s156 = sand.u32 %s69, 1
          %s157 = smul.addr %s156, 8
          %s158 = scalar_lea.vmem [#allocation8], %s157
          %160 = vsyncadd %s155, 0
          %s161 = smul.addr %s24, 2
          %s162 = sadd.s32 %s25, %s161
          %s163 = smul.addr %s162, 8
          %s164 = scalar_lea.hbm %s1, %s163
          %s166 = sshll.u32 %s164, 4
          %s167 = int_to_ptr.hbm [resolvable:$true] %s166
          %s168 = sshll.u32 %s158, 4
          %s169 = int_to_ptr.vmem [resolvable:$true] %s168
          %171 = dma.hbm_to_vmem [thread:$0]  %s167, 128, %s169, %s155
        $region24: #{tpu_custom_call.1} parent=15 // pred_fallthru
          _
      $region16: #{tpu_custom_call.1} parent=5 // pred_fallthru
        _
      %p172 = scmp.le.s32.totalorder 1, %s17
      %p173 = scmp.lt.s32.totalorder %s17, 5
      %p174 = pnand %p172, %p173
      %p175 = pneg %p174
      // Predicated region
      $region25: #{tpu_custom_call.1} parent=5 // pred_check
        _
      $region26: #{tpu_custom_call.1} parent=5 // pred_check_branch
        %177 = sbr.rel (%p174) target = $region28
      $region27: #{tpu_custom_call.1} parent=5 // pred_region
        %s178 = ssub.s32 %s17, 1
        %s179 = sand.u32 %s44, 1
        %s180 = scalar_lea.sflag [#allocation6], %s179
        %s181 = sand.u32 %s44, 1
        %s182 = smul.addr %s181, 4
        %s183 = scalar_lea.vmem [#allocation5], %s182
        // Predicated region
        $region29: #{tpu_custom_call.1} parent=27 // pred_check
          %p184 = pneg %p57
        $region30: #{tpu_custom_call.1} parent=27 // pred_check_branch
          %186 = sbr.rel (%p184) target = $region32
        $region31: #{tpu_custom_call.1} parent=27 // pred_region
          %188 = dma.done %s180, 64
        $region32: #{tpu_custom_call.1} parent=27 // pred_fallthru
          _
        %s189 = sand.u32 %s72, 1
        %s190 = scalar_lea.sflag [#allocation9], %s189
        %s191 = sand.u32 %s72, 1
        %s192 = smul.addr %s191, 8
        %s193 = scalar_lea.vmem [#allocation8], %s192
        // Predicated region
        $region33: #{tpu_custom_call.1} parent=27 // pred_check
          %p194 = pneg %p85
        $region34: #{tpu_custom_call.1} parent=27 // pred_check_branch
          %196 = sbr.rel (%p194) target = $region36
        $region35: #{tpu_custom_call.1} parent=27 // pred_region
          %198 = dma.done %s190, 128
        $region36: #{tpu_custom_call.1} parent=27 // pred_fallthru
          _
        %s199 = sand.u32 %s44, 1
        %s200 = scalar_lea.sflag [#allocation6], %s199
        %s201 = sand.u32 %s44, 1
        %s202 = smul.addr %s201, 4
        %s203 = scalar_lea.vmem [#allocation5], %s202
        %p204 = pneg %p57
        %p205 = pneg %p54
        %s206 = sand.u32 %s72, 1
        %s207 = scalar_lea.sflag [#allocation9], %s206
        %s208 = sand.u32 %s72, 1
        %s209 = smul.addr %s208, 8
        %s210 = scalar_lea.vmem [#allocation8], %s209
        %p211 = pneg %p85
        %p212 = pneg %p82
        %p213 = pneg %p111
        %p214 = pneg %p108
        %s215 = sand.u32 %s98, 1
        %s216 = scalar_lea.sflag [#allocation7], %s215
        %s217 = sand.u32 %s98, 1
        %s218 = smul.addr %s217, 4
        %s219 = scalar_lea.vmem [#allocation10], %s218
        %p220 = scmp.eq.s32.totalorder %s27, 0
        // Predicated region
        $region37: #{tpu_custom_call.1} parent=27 // pred_check
          %p221 = pneg %p220
        $region38: #{tpu_custom_call.1} parent=27 // pred_check_branch
          %223 = sbr.rel (%p221) target = $region40
        $region39: #{tpu_custom_call.1} parent=27 // pred_region
          %vm224 = vcmask 3072
          %225 = vst.msk [vmem:[#allocation2] sm:$0xf] %vm224, -inf
          %226 = vst.msk [vmem:[#allocation3] sm:$0xf] %vm224, 0.0
          %vm227 = vcmask 60416
          %228 = vst.msk [vmem:[#allocation4] sm:$0xf] %vm227, 0.0
        $region40: #{tpu_custom_call.1} parent=27 // pred_fallthru
          _
        %v229 = vld [vmem:[%s183] sm:$0xf]
        %v230 = vld [vmem:[%s193] sm:$0xff]
        %v231 = vld [vmem:[#allocation2] sm:$0xf]
        %vm232 = vcmask 1043456
        %v233 = vsel %vm232, %v229, -inf
        %234 = vmax.xlane.f32.xlu0 %v233
        %v235 = vpop.xlane.xlu0 %234
        %v236 = vmax.f32 %v231, %v235
        %v237 = vsub.f32 %v231, %v236
        %v238 = vmul.f32 %v237, 1.442695
        %v239 = vpow.pop %v238
        %241 = vset.pattern.permute.xlu0 0
        %242 = vperm.xlu0 %241, %v236
        %v243 = vpop.permute.xlu0 %242
        %v245 = vsub.f32 %v229, %v243
        %v246 = vmul.f32 %v245, 1.442695
        %v247 = vpow.pop %v246
        %v248 = vld [vmem:[#allocation3] sm:$0xf]
        %v249 = vmul.f32 %v239, %v248
        %v250 = vsel %vm232, %v247, 0.0
        %251 = vadd.xlane.f32.xlu0 %v250
        %v252 = vpop.xlane.xlu0 %251
        %v253 = vadd.f32 %v249, %v252
        %vm254 = vcmask 3072
        %255 = vst.msk [vmem:[#allocation3] sm:$0xf] %vm254, %v253
        %256 = vmatpush.xpose.msra.mxu0 0.0
        %257 = vmatpush.xpose.msra.mxu0 0.0
        %258 = vmatpush.xpose.msra.mxu0 0.0
        %259 = vmatpush.xpose.msra.mxu0 0.0
        %260 = vmatpush.xpose.msra.mxu0 0.0
        %261 = vmatpush.xpose.msra.mxu0 0.0
        %262 = vmatpush.xpose.msra.mxu0 0.0
        %263 = vmatpush.xpose.msra.mxu0 0.0
        %264 = vmatpush.xpose.msra.mxu0 0.0
        %265 = vmatpush.xpose.msra.mxu0 0.0
        %266 = vmatpush.xpose.msra.mxu0 0.0
        %267 = vmatpush.xpose.msra.mxu0 0.0
        %268 = vmatpush.xpose.msra.mxu0 0.0
        %269 = vmatpush.xpose.msra.mxu0 0.0
        %270 = vmatpush.xpose.msra.mxu0 0.0
        %271 = vmatpush.xpose.msra.mxu0 %v230
        %272 = vmatmul.f32.gmra.mxu0 %v247
        %v273 = vpop.f32.mrf.mxu0
        %v274 = vadd.f32 0.0, %v273
        %275 = vdwg.mxu0
        %v276 = vld [vmem:[#allocation4] sm:$0xf]
        %278 = vset.pattern.permute.xlu0 0
        %279 = vperm.xlu0 %278, %v239
        %v280 = vpop.permute.xlu0 %279
        %v282 = vmul.f32 %v280, %v276
        %v283 = vadd.f32 %v282, %v274
        %vm284 = vcmask 60416
        %285 = vst.msk [vmem:[#allocation4] sm:$0xf] %vm284, %v283
        %286 = vst.msk [vmem:[#allocation2] sm:$0xf] %vm254, %v236
        %p287 = scmp.eq.s32.totalorder %s27, 1
        // Predicated region
        $region41: #{tpu_custom_call.1} parent=27 // pred_check
          %p288 = pneg %p287
        $region42: #{tpu_custom_call.1} parent=27 // pred_check_branch
          %290 = sbr.rel (%p288) target = $region44
        $region43: #{tpu_custom_call.1} parent=27 // pred_region
          %v291 = vld [vmem:[#allocation3] sm:$0xf]
          %v292 = vrcp.pop %v291
          %v293 = vmul.f32 %v291, %v292
          %v294 = vsub.f32 1.0, %v293
          %v295 = vmul.f32 %v292, %v294
          %v296 = vadd.f32 %v292, %v295
          %vm297 = vweird.f32 %v291
          %vm298 = vweird.f32 %v292
          %vm299 = vmor %vm297, %vm298
          %v300 = vsel %vm299, %v292, %v296
          %v301 = vand.u32 2147483647, %v291
          %vm302 = vcmp.eq.f32.partialorder %v301, 8.507059e+37
          %v303 = vand.u32 %v291, 2147483648
          %v304 = vor.u32 1.1754944e-38, %v303
          %v305 = vsel %vm302, %v304, %v300
          %v306 = vld [vmem:[#allocation4] sm:$0xf]
          %308 = vset.pattern.permute.xlu0 0
          %309 = vperm.xlu0 %308, %v305
          %v310 = vpop.permute.xlu0 %309
          %v312 = vmul.f32 %v306, %v310
          %313 = vst.msk [vmem:[%s219] sm:$0xf] %vm284, %v312
        $region44: #{tpu_custom_call.1} parent=27 // pred_fallthru
          _
        %s314 = sand.u32 %s98, 1
        %s315 = scalar_lea.sflag [#allocation7], %s314
        %s316 = sand.u32 %s98, 1
        %s317 = smul.addr %s316, 4
        %s318 = scalar_lea.vmem [#allocation10], %s317
        // Predicated region
        $region45: #{tpu_custom_call.1} parent=27 // pred_check
          %p319 = pneg %p108
        $region46: #{tpu_custom_call.1} parent=27 // pred_check_branch
          %321 = sbr.rel (%p319) target = $region48
        $region47: #{tpu_custom_call.1} parent=27 // pred_region
          %323 = vsyncadd %s315, 0
          %s324 = smul.addr %s26, 4
          %s325 = scalar_lea.hbm %s2, %s324
          %s327 = sshll.u32 %s318, 4
          %s328 = int_to_ptr.vmem [resolvable:$true] %s327
          %s329 = sshll.u32 %s325, 4
          %s330 = int_to_ptr.hbm [resolvable:$true] %s329
          %332 = dma.vmem_to_hbm [thread:$0]  %s328, 64, %s330, %s315
        $region48: #{tpu_custom_call.1} parent=27 // pred_fallthru
          _
      $region28: #{tpu_custom_call.1} parent=5 // pred_fallthru
        _
      %p333 = scmp.le.s32.totalorder 2, %s17
      // Predicated region
      $region49: #{tpu_custom_call.1} parent=5 // pred_check
        %p334 = pneg %p333
      $region50: #{tpu_custom_call.1} parent=5 // pred_check_branch
        %336 = sbr.rel (%p334) target = $region52
      $region51: #{tpu_custom_call.1} parent=5 // pred_region
        %s337 = ssub.s32 %s17, 2
        // Predicated region
        $region53: #{tpu_custom_call.1} parent=51 // pred_check
          %p338 = pneg %p114
        $region54: #{tpu_custom_call.1} parent=51 // pred_check_branch
          %340 = sbr.rel (%p338) target = $region56
        $region55: #{tpu_custom_call.1} parent=51 // pred_region
          %s341 = sand.u32 %s99, 1
          %s342 = scalar_lea.sflag [#allocation7], %s341
          %s343 = sand.u32 %s99, 1
          %s344 = smul.addr %s343, 4
          %s345 = scalar_lea.vmem [#allocation10], %s344
          %347 = dma.done %s342, 64
        $region56: #{tpu_custom_call.1} parent=51 // pred_fallthru
          _
      $region52: #{tpu_custom_call.1} parent=5 // pred_fallthru
        _
    $region6: #{tpu_custom_call.1} parent=1 // loop_footer
      %s21 = sadd.s32 1, %s17
    $region7: #{tpu_custom_call.1} parent=1 // loop_footer_branch
      %16 = sbr.rel target = $region3
    $region8: #{tpu_custom_call.1} parent=1 // loop_exit
      _
    %348 = vsyncpa [#allocation6], 1
    %s349 = scalar_lea.sflag [#allocation6], 1
    %350 = vsyncpa %s349, 1
    %351 = vsyncpa [#allocation9], 1
    %s352 = scalar_lea.sflag [#allocation9], 1
    %353 = vsyncpa %s352, 1
    %354 = vsyncpa [#allocation7], 1
    %s355 = scalar_lea.sflag [#allocation7], 1
    %356 = vsyncpa %s355, 1

</llo_original>
